<compile_context>
chip_gen: v5e
topology: v5e:2x2
jax: 0.10.0
libtpu: 0.0.40
codegen_flags: <defaults>
</compile_context>

<pallas_src>
import functools

import jax
import jax.numpy as jnp
from jax import lax
from jax.experimental import pallas as pl
from jax.experimental.pallas import tpu as pltpu

LN_EPS = 1e-5


def _round_up(x, m):
    return (x + m - 1) // m * m


def _vmem_capacity_bytes():
    try:
        info = pltpu.get_tpu_info()
        cap = getattr(info, "vmem_capacity_bytes", None)
        if cap:
            return int(cap)
    except Exception:
        pass
    return 64 * 1024 * 1024  # conservative fallback (v7x per-TC VMEM)


def _patch_embed_kernel(x_ref, w_ref, p_ref, o_ref, *, inv_e):
    """Fused  (patches @ W + b) -> LayerNorm(E)  for one row tile.

    x_ref: (TR, K)      patch rows (bf16/f32)
    w_ref: (K, E_pad)   conv weight, zero-padded over E
    p_ref: (8, E_pad)   f32 packed params: row0=conv_b, row1=ln_gamma, row2=ln_beta
                        (padded lanes are 0 -> padded output lanes land at 0)
    o_ref: (TR, E_pad)
    """
    acc = jnp.dot(x_ref[...], w_ref[...], preferred_element_type=jnp.float32)
    params = p_ref[...]
    acc = acc + params[0:1]                                  # conv bias

    # LayerNorm stats over the real E lanes: padded lanes of acc are exactly 0
    # (zero-padded weight columns & bias), so plain sums with 1/E_real work
    # without any masking.  var = E[x^2] - E[x]^2, all in f32.
    mean = jnp.sum(acc, axis=-1, keepdims=True) * inv_e
    sumsq = jnp.sum(acc * acc, axis=-1, keepdims=True) * inv_e
    var = jnp.maximum(sumsq - mean * mean, 0.0)
    normed = (acc - mean) * lax.rsqrt(var + LN_EPS)
    # Padded lanes: gamma=0, beta=0 -> output 0 (sliced off by the wrapper).
    o_ref[...] = (normed * params[1:2] + params[2:3]).astype(o_ref.dtype)


def patch_embed(x, conv_w, conv_b, ln_g, ln_b, patch_size, *,
                tile_rows=1024, compute_dtype=jnp.bfloat16,
                out_dtype=None, out_layout="NCHW",
                vmem_budget_bytes=None):
    """x: (N, C, H, W).  Default: (N, E, H//P, W//P) in x.dtype (PyTorch layout).

    out_layout="NHWC" skips the final transpose and returns (N, Hp, Wp, E).
    out_dtype overrides the output element type (e.g. jnp.bfloat16) to halve
    output DMA when the consumer allows it.
    """
    N, C, H, W = x.shape
    E = conv_w.shape[0]
    P = patch_size
    assert H % P == 0 and W % P == 0, (H, W, P)
    Hp, Wp = H // P, W // P
    rows = N * Hp * Wp
    K = C * P * P
    E_pad = _round_up(E, 128)          # lane-dense output stores; K is NOT padded
    out_dtype = x.dtype if out_dtype is None else out_dtype

    in_bytes = jnp.dtype(compute_dtype).itemsize
    out_bytes = jnp.dtype(out_dtype).itemsize

    vmem_cap = _vmem_capacity_bytes()
    if vmem_budget_bytes is None:
        vmem_budget_bytes = max(16 * 1024 * 1024,
                                min(int(0.4 * vmem_cap), 64 * 1024 * 1024))

    def vmem_est(tr):
        return (2 * tr * K * in_bytes          # double-buffered patch tiles
                + 2 * K * E_pad * in_bytes     # weight (grid-invariant)
                + 2 * tr * E_pad * out_bytes   # double-buffered output tiles
                + 2 * tr * E_pad * 4           # f32 acc + LN epilogue temps
                + 2 * 8 * E_pad * 4)           # packed params (f32)

    # Largest row tile under the VMEM budget, keeping ~>=8 grid steps for
    # pipelining / v7x's two TensorCores, and never below 256 rows/tile
    # (v5e MXU fill) unless rows itself is smaller.
    tr = max(8, min(_round_up(tile_rows, 8), _round_up(rows, 8)))
    tr = min(tr, max(256, _round_up(pl.cdiv(rows, 8), 8)))
    while tr > 8 and vmem_est(tr) > vmem_budget_bytes:
        tr = _round_up(tr // 2, 8)
    tile_rows = tr

    vmem_limit_bytes = int(min(int(0.6 * vmem_cap),          # ~40 MiB on v7x
                               max(32 * 1024 * 1024,
                                   vmem_est(tile_rows) + 8 * 1024 * 1024)))
    assert vmem_est(tile_rows) <= vmem_limit_bytes, (
        "row tile does not fit the VMEM limit",
        tile_rows, vmem_est(tile_rows), vmem_limit_bytes)

    # im2col.  Cast first so the transpose writes compute_dtype bytes.  No
    # padding of the patch matrix: the last (partial) row block is handled by
    # the Pallas pipeline, and a block dim equal to the full array dim (K) is
    # legal for the lane axis.
    # TODO(synk): with an NHWC producer this transpose becomes a pure reshape;
    # pltpu.CompilerParams(allow_input_fusion=...) could also fold it into the
    # pallas_call input DMA.
    patches = x.astype(compute_dtype).reshape(N, C, Hp, P, Wp, P)
    patches = jnp.transpose(patches, (0, 2, 4, 1, 3, 5)).reshape(rows, K)

    w2d = conv_w.reshape(E, K).T.astype(compute_dtype)            # (K, E)
    if E_pad != E:
        w2d = jnp.pad(w2d, ((0, 0), (0, E_pad - E)))

    # Pack bias / gamma / beta into one small f32 operand, sublane-padded.
    params = jnp.stack([conv_b, ln_g, ln_b]).astype(jnp.float32)  # (3, E)
    params = jnp.pad(params, ((0, 8 - 3), (0, E_pad - E)))        # (8, E_pad)

    grid = (pl.cdiv(rows, tile_rows),)
    cost = pl.CostEstimate(
        flops=2 * rows * K * E_pad,
        transcendentals=rows,
        bytes_accessed=(rows * K * in_bytes
                        + K * E_pad * in_bytes
                        + 8 * E_pad * 4
                        + rows * E_pad * out_bytes))

    kernel = functools.partial(_patch_embed_kernel, inv_e=1.0 / E)

    out_rows = pl.pallas_call(
        kernel,
        out_shape=jax.ShapeDtypeStruct((rows, E_pad), out_dtype),
        grid_spec=pltpu.PrefetchScalarGridSpec(
            num_scalar_prefetch=0,
            grid=grid,
            in_specs=[
                pl.BlockSpec((tile_rows, K), lambda i: (i, 0)),
                pl.BlockSpec((K, E_pad), lambda i: (0, 0)),
                pl.BlockSpec((8, E_pad), lambda i: (0, 0)),
            ],
            out_specs=pl.BlockSpec((tile_rows, E_pad), lambda i: (i, 0)),
        ),
        compiler_params=pltpu.CompilerParams(
            dimension_semantics=("parallel",),
            vmem_limit_bytes=vmem_limit_bytes),
        cost_estimate=cost,
    )(patches, w2d, params)

    out = out_rows if E_pad == E else out_rows[:, :E]
    out = out.reshape(N, Hp, Wp, E)
    if out_layout == "NHWC":
        return out
    return jnp.transpose(out, (0, 3, 1, 2))


def _reference(x, conv_w, conv_b, ln_g, ln_b, patch_size):
    """Pure-JAX reference mirroring the PyTorch forward."""
    out = lax.conv_general_dilated(
        x, conv_w,
        window_strides=(patch_size, patch_size),
        padding="VALID",
        dimension_numbers=("NCHW", "OIHW", "NCHW"),
    ) + conv_b.reshape(1, -1, 1, 1)
    nhwc = jnp.transpose(out, (0, 2, 3, 1))
    mean = jnp.mean(nhwc, axis=-1, keepdims=True)
    var = jnp.mean((nhwc - mean) ** 2, axis=-1, keepdims=True)
    nhwc = (nhwc - mean) / jnp.sqrt(var + LN_EPS) * ln_g + ln_b
    return jnp.transpose(nhwc, (0, 3, 1, 2))


if __name__ == "__main__":
    key = jax.random.PRNGKey(0)
    k_x, k_w, k_b = jax.random.split(key, 3)

    # Small shapes: batch=2, msi_channels=4, spatial=16, patch_size=4, embed=32
    N, C, H, W = 2, 4, 16, 16
    P = 4
    E = 32

    x = jax.random.normal(k_x, (N, C, H, W), dtype=jnp.float32)
    conv_w = 0.1 * jax.random.normal(k_w, (E, C, P, P), dtype=jnp.float32)
    conv_b = 0.05 * jax.random.normal(k_b, (E,), dtype=jnp.float32)
    ln_g = jnp.ones((E,), dtype=jnp.float32)   # PyTorch LayerNorm default init
    ln_b = jnp.zeros((E,), dtype=jnp.float32)

    ref = _reference(x, conv_w, conv_b, ln_g, ln_b, P)

    # Exact (f32 MXU) path.
    out_f32 = jax.block_until_ready(
        patch_embed(x, conv_w, conv_b, ln_g, ln_b, P,
                    compute_dtype=jnp.float32))
    assert out_f32.shape == (N, E, H // P, W // P), out_f32.shape
    assert jnp.allclose(out_f32, ref, atol=1e-4, rtol=1e-4), float(
        jnp.max(jnp.abs(out_f32 - ref)))

    # Default bf16-operand path (f32 accumulation + f32 LayerNorm).
    out_bf16 = jax.block_until_ready(
        patch_embed(x, conv_w, conv_b, ln_g, ln_b, P))
    assert out_bf16.shape == (N, E, H // P, W // P), out_bf16.shape
    assert jnp.allclose(out_bf16, ref, atol=5e-2, rtol=5e-2), float(
        jnp.max(jnp.abs(out_bf16 - ref)))

    # NHWC fast-path (skips final transpose) should match the reference too.
    out_nhwc = jax.block_until_ready(
        patch_embed(x, conv_w, conv_b, ln_g, ln_b, P, out_layout="NHWC",
                    compute_dtype=jnp.float32))
    assert out_nhwc.shape == (N, H // P, W // P, E), out_nhwc.shape
    assert jnp.allclose(jnp.transpose(out_nhwc, (0, 3, 1, 2)), ref,
                        atol=1e-4, rtol=1e-4)

    print("KERNEL_OK")
</pallas_src>

<mosaic_0001>
module attributes {stable_mosaic.version = 11 : i64} {
  func.func @_patch_embed_kernel(%arg0: i32, %arg1: memref<32x64xf32, #tpu.memory_space<vmem>>, %arg2: memref<64x128xf32, #tpu.memory_space<vmem>>, %arg3: memref<8x128xf32, #tpu.memory_space<vmem>>, %arg4: memref<32x128xf32, #tpu.memory_space<vmem>>) attributes {dimension_semantics = [#tpu.dimension_semantics<parallel>], iteration_bounds = array<i64: 1>, scalar_prefetch = 0 : i64, scratch_operands = 0 : i64, tpu.core_type = #tpu.core_type<tc>, window_params = [{transform_indices = @transform_0, window_bounds = array<i64: 32, 64>}, {pipeline_mode = #tpu.pipeline_mode<synchronous>, transform_indices = @transform_1, window_bounds = array<i64: 64, 128>}, {pipeline_mode = #tpu.pipeline_mode<synchronous>, transform_indices = @transform_2, window_bounds = array<i64: 8, 128>}, {transform_indices = @transform_3, window_bounds = array<i64: 32, 128>}]} {
    %c0 = arith.constant 0 : index
    %c0_0 = arith.constant 0 : index
    %0 = vector.load %arg1[%c0, %c0_0] : memref<32x64xf32, #tpu.memory_space<vmem>>, vector<32x64xf32>
    %c0_1 = arith.constant 0 : index
    %c0_2 = arith.constant 0 : index
    %1 = vector.load %arg2[%c0_1, %c0_2] : memref<64x128xf32, #tpu.memory_space<vmem>>, vector<64x128xf32>
    %cst = arith.constant dense<0.000000e+00> : vector<32x128xf32>
    %2 = tpu.matmul %0, %1, %cst {dimension_numbers = #tpu.dot_dimension_numbers<[1], [0], [0], [1], [0, 0, 1, 1], [], []>} : vector<32x64xf32>, vector<64x128xf32>, vector<32x128xf32> -> vector<32x128xf32>
    %c0_3 = arith.constant 0 : index
    %c0_4 = arith.constant 0 : index
    %3 = vector.load %arg3[%c0_3, %c0_4] : memref<8x128xf32, #tpu.memory_space<vmem>>, vector<8x128xf32>
    %4 = vector.extract_strided_slice %3 {offsets = [0, 0], sizes = [1, 128], strides = [1, 1]} : vector<8x128xf32> to vector<1x128xf32>
    %5 = vector.broadcast %4 : vector<1x128xf32> to vector<32x128xf32>
    %6 = arith.addf %2, %5 : vector<32x128xf32>
    %cst_5 = arith.constant dense<0.000000e+00> : vector<32xf32>
    %7 = vector.multi_reduction <add>, %6, %cst_5 [1] : vector<32x128xf32> to vector<32xf32>
    %8 = vector.shape_cast %7 : vector<32xf32> to vector<32x1xf32>
    %cst_6 = arith.constant 3.125000e-02 : f32
    %9 = vector.broadcast %cst_6 : f32 to vector<32x1xf32>
    %10 = arith.mulf %8, %9 : vector<32x1xf32>
    %11 = arith.mulf %6, %6 : vector<32x128xf32>
    %cst_7 = arith.constant dense<0.000000e+00> : vector<32xf32>
    %12 = vector.multi_reduction <add>, %11, %cst_7 [1] : vector<32x128xf32> to vector<32xf32>
    %13 = vector.shape_cast %12 : vector<32xf32> to vector<32x1xf32>
    %cst_8 = arith.constant 3.125000e-02 : f32
    %14 = vector.broadcast %cst_8 : f32 to vector<32x1xf32>
    %15 = arith.mulf %13, %14 : vector<32x1xf32>
    %16 = arith.mulf %10, %10 : vector<32x1xf32>
    %17 = arith.subf %15, %16 : vector<32x1xf32>
    %cst_9 = arith.constant 0.000000e+00 : f32
    %18 = vector.broadcast %cst_9 : f32 to vector<32x1xf32>
    %19 = arith.maximumf %17, %18 : vector<32x1xf32>
    %20 = vector.broadcast %10 : vector<32x1xf32> to vector<32x128xf32>
    %21 = arith.subf %6, %20 : vector<32x128xf32>
    %cst_10 = arith.constant 9.99999974E-6 : f32
    %22 = vector.broadcast %cst_10 : f32 to vector<32x1xf32>
    %23 = arith.addf %19, %22 : vector<32x1xf32>
    %24 = math.rsqrt %23 : vector<32x1xf32>
    %25 = vector.broadcast %24 : vector<32x1xf32> to vector<32x128xf32>
    %26 = arith.mulf %21, %25 : vector<32x128xf32>
    %27 = vector.extract_strided_slice %3 {offsets = [1, 0], sizes = [1, 128], strides = [1, 1]} : vector<8x128xf32> to vector<1x128xf32>
    %28 = vector.broadcast %27 : vector<1x128xf32> to vector<32x128xf32>
    %29 = arith.mulf %26, %28 : vector<32x128xf32>
    %30 = vector.extract_strided_slice %3 {offsets = [2, 0], sizes = [1, 128], strides = [1, 1]} : vector<8x128xf32> to vector<1x128xf32>
    %31 = vector.broadcast %30 : vector<1x128xf32> to vector<32x128xf32>
    %32 = arith.addf %29, %31 : vector<32x128xf32>
    %c0_11 = arith.constant 0 : index
    %c0_12 = arith.constant 0 : index
    %33 = vector.load %arg4[%c0_11, %c0_12] : memref<32x128xf32, #tpu.memory_space<vmem>>, vector<32x128xf32>
    tpu.vector_store %arg4[%c0_11, %c0_12], %32 {strides = array<i32>} : memref<32x128xf32, #tpu.memory_space<vmem>>, vector<32x128xf32>,
    return
  }
  func.func @transform_0(%arg0: i32) -> (i32, i32) {
    %c0_i32 = arith.constant 0 : i32
    %c0_i32_0 = arith.constant 0 : i32
    return %arg0, %c0_i32 : i32, i32
  }
  func.func @transform_1(%arg0: i32) -> (i32, i32) {
    %c0_i32 = arith.constant 0 : i32
    %c0_i32_0 = arith.constant 0 : i32
    %c0_i32_1 = arith.constant 0 : i32
    return %c0_i32, %c0_i32_0 : i32, i32
  }
  func.func @transform_2(%arg0: i32) -> (i32, i32) {
    %c0_i32 = arith.constant 0 : i32
    %c0_i32_0 = arith.constant 0 : i32
    %c0_i32_1 = arith.constant 0 : i32
    return %c0_i32, %c0_i32_0 : i32, i32
  }
  func.func @transform_3(%arg0: i32) -> (i32, i32) {
    %c0_i32 = arith.constant 0 : i32
    %c0_i32_0 = arith.constant 0 : i32
    return %arg0, %c0_i32 : i32, i32
  }
}

</mosaic_0001>

<llo_original>
// kernel: tpu_custom_call.1
$region0: #{tpu_custom_call.1}
  #allocation0 [shape = 'u32[]', space=smem, size = 0x4, offset = 0x4, fixed_abs, tag = 'smem constant byte address 0x4 - core index']
  #allocation1 [shape = 'u32[72,128]{1,0:T(1,128)}', space=vmem, size = 0x9000, scoped, tag = 'internal scratch']
  %s0 = inlined_call_operand.hbm [shape: f32[32,64], index: 0, kind: input, shape index: {}]
  %s1 = inlined_call_operand.hbm [shape: f32[64,128], index: 1, kind: input, shape index: {}]
  %s2 = inlined_call_operand.hbm [shape: f32[8,128], index: 2, kind: input, shape index: {}]
  %s3 = inlined_call_operand.hbm [shape: f32[32,128], index: 3, kind: output, shape index: {}]
  %s4 = sld [smem:[#allocation0]]
  $region34: #{tpu_custom_call.1} parent=0
    _
  %s6 = ssub.s32 1, %s4
  %s7 = scalar_select 0, %s6, %s4
  $region1: #{tpu_custom_call.1} parent=0
    #allocation2 [shape = 'u8[16384]{0}', space=vmem, size = 0x4000, scoped, tag = 'input window, operand 0, single buffered']
    #allocation3 [shape = 's32[1]{0}', space=sflag, size = 0x4, scoped, tag = 'scoped memory for tpu_custom_call.1']
    #allocation4 [shape = 's32[1]{0}', space=sflag, size = 0x4, scoped, tag = 'scoped memory for tpu_custom_call.1']
    #allocation5 [shape = 'u8[32768]{0}', space=vmem, size = 0x8000, scoped, tag = 'input window, operand 1, single buffered']
    #allocation6 [shape = 's32[1]{0}', space=sflag, size = 0x4, scoped, tag = 'scoped memory for tpu_custom_call.1']
    #allocation7 [shape = 'u8[4096]{0}', space=vmem, size = 0x1000, scoped, tag = 'input window, operand 2, single buffered']
    #allocation8 [shape = 'u8[16384]{0}', space=vmem, size = 0x4000, scoped, tag = 'output window, operand 0, single buffered']
    %8 = vsyncpa [#allocation3], 0
    %9 = vsyncpa [#allocation6], 0
    %10 = vsyncpa [#allocation4], 0
    // Predicated region
    $region2: #{tpu_custom_call.1} parent=1 // pred_check
      _
    $region3: #{tpu_custom_call.1} parent=1 // pred_check_branch
      %12 = sbr.rel (0) target = $region5
    $region4: #{tpu_custom_call.1} parent=1 // pred_region
      %14 = vsyncadd [#allocation3], 0
      %s15 = sshll.u32 %s0, 4
      %s16 = int_to_ptr.hbm [resolvable:$true] %s15
      %s17 = sshll.u32 [#allocation2], 4
      %s18 = int_to_ptr.vmem [resolvable:$true] %s17
      %23 = dma.hbm_to_vmem [thread:$0]  %s16, 512, %s18, [#allocation3], 128, 128, 8
    $region5: #{tpu_custom_call.1} parent=1 // pred_fallthru
      _
    // Predicated region
    $region6: #{tpu_custom_call.1} parent=1 // pred_check
      _
    $region7: #{tpu_custom_call.1} parent=1 // pred_check_branch
      %25 = sbr.rel (0) target = $region9
    $region8: #{tpu_custom_call.1} parent=1 // pred_region
      %27 = vsyncadd [#allocation6], 0
      %s28 = sshll.u32 %s1, 4
      %s29 = int_to_ptr.hbm [resolvable:$true] %s28
      %s30 = sshll.u32 [#allocation5], 4
      %s31 = int_to_ptr.vmem [resolvable:$true] %s30
      %36 = dma.hbm_to_vmem [thread:$0]  %s29, 1024, %s31, [#allocation6], 128, 128, 8
    $region9: #{tpu_custom_call.1} parent=1 // pred_fallthru
      _
    // Predicated region
    $region10: #{tpu_custom_call.1} parent=1 // pred_check
      _
    $region11: #{tpu_custom_call.1} parent=1 // pred_check_branch
      %38 = sbr.rel (0) target = $region13
    $region12: #{tpu_custom_call.1} parent=1 // pred_region
      %40 = vsyncadd [#allocation6], 0
      %s42 = sshll.u32 %s2, 4
      %s43 = int_to_ptr.hbm [resolvable:$true] %s42
      %s44 = sshll.u32 [#allocation7], 4
      %s45 = int_to_ptr.vmem [resolvable:$true] %s44
      %47 = dma.hbm_to_vmem [thread:$0]  %s43, 128, %s45, [#allocation6]
    $region13: #{tpu_custom_call.1} parent=1 // pred_fallthru
      _
    // Predicated region
    $region14: #{tpu_custom_call.1} parent=1 // pred_check
      _
    $region15: #{tpu_custom_call.1} parent=1 // pred_check_branch
      %49 = sbr.rel (0) target = $region17
    $region16: #{tpu_custom_call.1} parent=1 // pred_region
      %51 = dma.done [#allocation3], 512
    $region17: #{tpu_custom_call.1} parent=1 // pred_fallthru
      _
    // Predicated region
    $region18: #{tpu_custom_call.1} parent=1 // pred_check
      _
    $region19: #{tpu_custom_call.1} parent=1 // pred_check_branch
      %53 = sbr.rel (0) target = $region21
    $region20: #{tpu_custom_call.1} parent=1 // pred_region
      %55 = dma.done [#allocation6], 1024
    $region21: #{tpu_custom_call.1} parent=1 // pred_fallthru
      _
    // Predicated region
    $region22: #{tpu_custom_call.1} parent=1 // pred_check
      _
    $region23: #{tpu_custom_call.1} parent=1 // pred_check_branch
      %57 = sbr.rel (0) target = $region25
    $region24: #{tpu_custom_call.1} parent=1 // pred_region
      %59 = dma.done [#allocation6], 128
    $region25: #{tpu_custom_call.1} parent=1 // pred_fallthru
      _
    %v60 = vld [vmem:[#allocation2] sm:$0xff]
    %v61 = vld [vmem:[#allocation2 + $0x8] sm:$0xff]
    %v62 = vld [vmem:[#allocation2 + $0x10] sm:$0xff]
    %v63 = vld [vmem:[#allocation2 + $0x18] sm:$0xff]
    %v64 = vld [vmem:[#allocation5] sm:$0xff]
    %v65 = vld [vmem:[#allocation5 + $0x8] sm:$0xff]
    %v66 = vld [vmem:[#allocation5 + $0x10] sm:$0xff]
    %v67 = vld [vmem:[#allocation5 + $0x18] sm:$0xff]
    %v68 = vld [vmem:[#allocation5 + $0x20] sm:$0xff]
    %v69 = vld [vmem:[#allocation5 + $0x28] sm:$0xff]
    %v70 = vld [vmem:[#allocation5 + $0x30] sm:$0xff]
    %v71 = vld [vmem:[#allocation5 + $0x38] sm:$0xff]
    %v72 = vld [vmem:[#allocation7] sm:$0xff]
    %v73 = vperm.slane %v72, 0
    %vm74 = vcmask 523264
    %v76 = vsel %vm74, %v60, 0
    %v79 = vsel %vm74, %v61, 0
    %v82 = vsel %vm74, %v62, 0
    %v85 = vsel %vm74, %v63, 0
    %87 = vmatpush.msra.mxu0 0.0
    %88 = vmatpush.msra.mxu0 0.0
    %89 = vmatpush.msra.mxu0 0.0
    %90 = vmatpush.msra.mxu0 0.0
    %91 = vmatpush.msra.mxu0 0.0
    %92 = vmatpush.msra.mxu0 0.0
    %93 = vmatpush.msra.mxu0 0.0
    %94 = vmatpush.msra.mxu0 0.0
    %95 = vmatpush.msra.mxu0 %v71
    %96 = vmatpush.msra.mxu0 %v70
    %97 = vmatpush.msra.mxu0 %v69
    %98 = vmatpush.msra.mxu0 %v68
    %99 = vmatpush.msra.mxu0 %v67
    %100 = vmatpush.msra.mxu0 %v66
    %101 = vmatpush.msra.mxu0 %v65
    %102 = vmatpush.msra.mxu0 %v64
    %103 = vmatmul.f32.gmra.mxu0 %v76
    %v104 = vpop.f32.mrf.mxu0
    %v105 = vadd.f32 %v73, %v104
    %106 = vmatmul.f32.gmra.mxu0 %v79
    %v107 = vpop.f32.mrf.mxu0
    %v108 = vadd.f32 %v73, %v107
    %109 = vmatmul.f32.gmra.mxu0 %v82
    %v110 = vpop.f32.mrf.mxu0
    %v111 = vadd.f32 %v73, %v110
    %112 = vmatmul.f32.gmra.mxu0 %v85
    %v113 = vpop.f32.mrf.mxu0
    %v114 = vadd.f32 %v73, %v113
    %115 = vdwg.mxu0
    %116 = vadd.xlane.f32.xlu0 %v105
    %v117 = vpop.xlane.xlu0 %116
    %118 = vadd.xlane.f32.xlu0 %v108
    %v119 = vpop.xlane.xlu0 %118
    %120 = vadd.xlane.f32.xlu0 %v111
    %v121 = vpop.xlane.xlu0 %120
    %122 = vadd.xlane.f32.xlu0 %v114
    %v123 = vpop.xlane.xlu0 %122
    %v124 = vmul.f32 %v117, 0.03125
    %v125 = vmul.f32 %v119, 0.03125
    %v126 = vmul.f32 %v121, 0.03125
    %v127 = vmul.f32 %v123, 0.03125
    %v128 = vmul.f32 %v105, %v105
    %v129 = vmul.f32 %v108, %v108
    %v130 = vmul.f32 %v111, %v111
    %v131 = vmul.f32 %v114, %v114
    %132 = vadd.xlane.f32.xlu0 %v128
    %v133 = vpop.xlane.xlu0 %132
    %134 = vadd.xlane.f32.xlu0 %v129
    %v135 = vpop.xlane.xlu0 %134
    %136 = vadd.xlane.f32.xlu0 %v130
    %v137 = vpop.xlane.xlu0 %136
    %138 = vadd.xlane.f32.xlu0 %v131
    %v139 = vpop.xlane.xlu0 %138
    %v140 = vmul.f32 %v133, 0.03125
    %v141 = vmul.f32 %v135, 0.03125
    %v142 = vmul.f32 %v137, 0.03125
    %v143 = vmul.f32 %v139, 0.03125
    %v144 = vmul.f32 %v124, %v124
    %v145 = vmul.f32 %v125, %v125
    %v146 = vmul.f32 %v126, %v126
    %v147 = vmul.f32 %v127, %v127
    %v148 = vsub.f32 %v140, %v144
    %v149 = vsub.f32 %v141, %v145
    %v150 = vsub.f32 %v142, %v146
    %v151 = vsub.f32 %v143, %v147
    %v152 = vmax.f32 %v148, 0.0
    %v153 = vmax.f32 %v149, 0.0
    %v154 = vmax.f32 %v150, 0.0
    %v155 = vmax.f32 %v151, 0.0
    %v156 = vsub.f32 %v105, %v124
    %v157 = vsub.f32 %v108, %v125
    %v158 = vsub.f32 %v111, %v126
    %v159 = vsub.f32 %v114, %v127
    %v160 = vadd.f32 %v152, 1e-05
    %v161 = vadd.f32 %v153, 1e-05
    %v162 = vadd.f32 %v154, 1e-05
    %v163 = vadd.f32 %v155, 1e-05
    %v164 = vrsqrt.pop %v160
    %v165 = vmul.f32 %v164, %v160
    %v166 = vmul.f32 %v165, %v164
    %v167 = vmul.f32 0.5, %v166
    %v168 = vsub.f32 1.5, %v167
    %v169 = vmul.f32 %v164, %v168
    %vm170 = vweird.f32 %v160
    %vm171 = vweird.f32 %v164
    %vm172 = vmor %vm170, %vm171
    %v173 = vsel %vm172, %v164, %v169
    %v174 = vrsqrt.pop %v161
    %v175 = vmul.f32 %v174, %v161
    %v176 = vmul.f32 %v175, %v174
    %v177 = vmul.f32 0.5, %v176
    %v178 = vsub.f32 1.5, %v177
    %v179 = vmul.f32 %v174, %v178
    %vm180 = vweird.f32 %v161
    %vm181 = vweird.f32 %v174
    %vm182 = vmor %vm180, %vm181
    %v183 = vsel %vm182, %v174, %v179
    %v184 = vrsqrt.pop %v162
    %v185 = vmul.f32 %v184, %v162
    %v186 = vmul.f32 %v185, %v184
    %v187 = vmul.f32 0.5, %v186
    %v188 = vsub.f32 1.5, %v187
    %v189 = vmul.f32 %v184, %v188
    %vm190 = vweird.f32 %v162
    %vm191 = vweird.f32 %v184
    %vm192 = vmor %vm190, %vm191
    %v193 = vsel %vm192, %v184, %v189
    %v194 = vrsqrt.pop %v163
    %v195 = vmul.f32 %v194, %v163
    %v196 = vmul.f32 %v195, %v194
    %v197 = vmul.f32 0.5, %v196
    %v198 = vsub.f32 1.5, %v197
    %v199 = vmul.f32 %v194, %v198
    %vm200 = vweird.f32 %v163
    %vm201 = vweird.f32 %v194
    %vm202 = vmor %vm200, %vm201
    %v203 = vsel %vm202, %v194, %v199
    %v204 = vmul.f32 %v156, %v173
    %v205 = vmul.f32 %v157, %v183
    %v206 = vmul.f32 %v158, %v193
    %v207 = vmul.f32 %v159, %v203
    %v208 = vperm.slane %v72, 1
    %v209 = vmul.f32 %v204, %v208
    %v210 = vmul.f32 %v205, %v208
    %v211 = vmul.f32 %v206, %v208
    %v212 = vmul.f32 %v207, %v208
    %v213 = vperm.slane %v72, 2
    %v214 = vadd.f32 %v209, %v213
    %v215 = vadd.f32 %v210, %v213
    %v216 = vadd.f32 %v211, %v213
    %v217 = vadd.f32 %v212, %v213
    %218 = vst [vmem:[#allocation8] sm:$0xff] %v214
    %219 = vst [vmem:[#allocation8 + $0x8] sm:$0xff] %v215
    %220 = vst [vmem:[#allocation8 + $0x10] sm:$0xff] %v216
    %221 = vst [vmem:[#allocation8 + $0x18] sm:$0xff] %v217
    // Predicated region
    $region26: #{tpu_custom_call.1} parent=1 // pred_check
      _
    $region27: #{tpu_custom_call.1} parent=1 // pred_check_branch
      %223 = sbr.rel (0) target = $region29
    $region28: #{tpu_custom_call.1} parent=1 // pred_region
      %225 = vsyncadd [#allocation4], 0
      %s226 = sshll.u32 [#allocation8], 4
      %s227 = int_to_ptr.vmem [resolvable:$true] %s226
      %s228 = sshll.u32 %s3, 4
      %s229 = int_to_ptr.hbm [resolvable:$true] %s228
      %234 = dma.vmem_to_hbm [thread:$0]  %s227, 512, %s229, [#allocation4], 128, 128, 8
    $region29: #{tpu_custom_call.1} parent=1 // pred_fallthru
      _
    // Predicated region
    $region30: #{tpu_custom_call.1} parent=1 // pred_check
      _
    $region31: #{tpu_custom_call.1} parent=1 // pred_check_branch
      %236 = sbr.rel (0) target = $region33
    $region32: #{tpu_custom_call.1} parent=1 // pred_region
      %238 = dma.done [#allocation4], 512
    $region33: #{tpu_custom_call.1} parent=1 // pred_fallthru
      _
    %239 = vsyncpa [#allocation3], 1
    %240 = vsyncpa [#allocation6], 1
    %241 = vsyncpa [#allocation4], 1

</llo_original>
